<compile_context>
chip_gen: v7x
topology: tpu7x:2x2x1
jax: 0.10.0
libtpu: 0.0.40
codegen_flags: <defaults>
</compile_context>

<pallas_src>
import jax
import jax.numpy as jnp
from jax.experimental import pallas as pl
from jax.experimental.pallas import tpu as pltpu


def _round_up(x, m):
    return ((x + m - 1) // m) * m


def _pick_block_b(B):
    # Small/medium batch (RL stepping): one block, zero grid-step overhead.
    if B <= 512:
        return _round_up(B, 8)
    # Large batch: fat blocks to amortize the ~0.35 us/step overhead on
    # single-TC v5e/v6e, while guaranteeing >= 2 grid steps so the "parallel"
    # batch axis shards across both TensorCores on v7x.
    half = _round_up((B + 1) // 2, 8)
    return min(1024, half)


def _policy_kernel(s_ref, w1_ref, b1_ref, wh_ref, bh_ref, mu_ref, std_ref):
    A = mu_ref.shape[1]

    # ---- hidden layer on the VPU: x = relu(s @ W1 + b1), K = dim_state tiny ----
    s = s_ref[...].astype(jnp.float32)                    # (Bt, dim_state)
    x = b1_ref[...].astype(jnp.float32)                   # (1, H) -> broadcasts
    for d in range(s_ref.shape[1]):                       # static, tiny trip count
        x = x + s[:, d:d + 1] * w1_ref[d:d + 1, :]        # (Bt,1)*(1,H) broadcast FMA
    x = jnp.maximum(x, 0.0)                               # (Bt, H)

    # ---- fused heads: one MXU matmul against [Wmu | Wls] (H, 2A) ----
    h = jnp.dot(x, wh_ref[...], preferred_element_type=jnp.float32)
    h = h + bh_ref[...]                                   # (Bt, 2A)

    mu_ref[...] = h[:, :A].astype(mu_ref.dtype)
    # Only the A log_std columns hit the EUP.
    std_ref[...] = jnp.exp(jnp.tanh(h[:, A:])).astype(std_ref.dtype)


def fuse_head_params(wmu, bmu, wls, bls):
    """One-time (policy init) fusion of the two 1-wide heads into (H, 2A)/(1, 2A)."""
    wh = jnp.concatenate([wmu, wls], axis=1)              # cols [0,A)=mu, [A,2A)=log_std
    bh = jnp.concatenate([bmu, bls], axis=1)
    return wh, bh


@jax.jit
def mlp_gaussian_policy(s, w1, b1, wh, bh):
    """s: (B, dim_state). w1:(in,out), b1:(1,out); wh/bh from fuse_head_params.

    Returns (mu, std), each (B, dim_action)."""
    B, dim_state = s.shape
    H = w1.shape[1]
    A = wh.shape[1] // 2

    block_b = _pick_block_b(B)
    B_pad = _round_up(B, block_b)
    s_p = s if B_pad == B else jnp.pad(s, ((0, B_pad - B), (0, 0)))
    grid = (B_pad // block_b,)

    cost = pl.CostEstimate(
        flops=2 * B_pad * (dim_state * H + H * 2 * A),
        transcendentals=2 * B_pad * A,
        bytes_accessed=4 * (s_p.size + w1.size + b1.size + wh.size + bh.size
                            + 2 * B_pad * A),
    )

    mu, std = pl.pallas_call(
        _policy_kernel,
        out_shape=(jax.ShapeDtypeStruct((B_pad, A), s.dtype),
                   jax.ShapeDtypeStruct((B_pad, A), s.dtype)),
        grid_spec=pltpu.PrefetchScalarGridSpec(
            num_scalar_prefetch=0,
            grid=grid,
            in_specs=[
                pl.BlockSpec((block_b, dim_state), lambda i: (i, 0)),  # s tile
                pl.BlockSpec((dim_state, H), lambda i: (0, 0)),        # W1 (VMEM-resident)
                pl.BlockSpec((1, H), lambda i: (0, 0)),                # b1 (resident)
                pl.BlockSpec((H, 2 * A), lambda i: (0, 0)),            # fused head weights
                pl.BlockSpec((1, 2 * A), lambda i: (0, 0)),            # fused head bias
            ],
            out_specs=[
                pl.BlockSpec((block_b, A), lambda i: (i, 0)),          # mu
                pl.BlockSpec((block_b, A), lambda i: (i, 0)),          # std
            ],
        ),
        compiler_params=pltpu.CompilerParams(
            dimension_semantics=("parallel",) if grid[0] > 1 else ("arbitrary",),
        ),
        cost_estimate=cost,
    )(s_p, w1, b1, wh, bh)

    # Row trim only (batch padding); columns are already exact.
    return mu[:B], std[:B]


def _reference(s, w1, b1, wmu, bmu, wls, bls):
    x = jnp.maximum(s @ w1 + b1, 0.0)
    mu = x @ wmu + bmu
    std = jnp.exp(jnp.tanh(x @ wls + bls))
    return mu, std


if __name__ == "__main__":
    # Pendulum-v1: dim_state=3, dim_action=1, dim_hiddens=(512,)
    dim_state, dim_action, hidden = 3, 1, 512
    batch = 8

    key = jax.random.PRNGKey(0)
    ks = jax.random.split(key, 7)

    # Deterministic synthetic parameters (PyTorch-like uniform fan-in init).
    def uinit(k, shape, fan_in):
        bound = 1.0 / jnp.sqrt(fan_in)
        return jax.random.uniform(k, shape, jnp.float32, -bound, bound)

    s   = jax.random.normal(ks[0], (batch, dim_state), jnp.float32)
    w1  = uinit(ks[1], (dim_state, hidden), dim_state)
    b1  = uinit(ks[2], (1, hidden), dim_state)
    wmu = uinit(ks[3], (hidden, dim_action), hidden)
    bmu = uinit(ks[4], (1, dim_action), hidden)
    wls = uinit(ks[5], (hidden, dim_action), hidden)
    bls = uinit(ks[6], (1, dim_action), hidden)

    # Head fusion happens once, outside the per-step hot path.
    wh, bh = fuse_head_params(wmu, bmu, wls, bls)

    mu, std = mlp_gaussian_policy(s, w1, b1, wh, bh)
    jax.block_until_ready((mu, std))

    mu_ref, std_ref = _reference(s, w1, b1, wmu, bmu, wls, bls)
    assert mu.shape == (batch, dim_action) and std.shape == (batch, dim_action)
    assert jnp.allclose(mu, mu_ref, atol=1e-5, rtol=1e-5)
    assert jnp.allclose(std, std_ref, atol=1e-5, rtol=1e-5)

    print("KERNEL_OK")
</pallas_src>

<mosaic_0001>
module attributes {stable_mosaic.version = 11 : i64} {
  func.func @_policy_kernel(%arg0: i32, %arg1: memref<8x3xf32, #tpu.memory_space<vmem>>, %arg2: memref<3x512xf32, #tpu.memory_space<vmem>>, %arg3: memref<1x512xf32, #tpu.memory_space<vmem>>, %arg4: memref<512x2xf32, #tpu.memory_space<vmem>>, %arg5: memref<1x2xf32, #tpu.memory_space<vmem>>, %arg6: memref<8x1xf32, #tpu.memory_space<vmem>>, %arg7: memref<8x1xf32, #tpu.memory_space<vmem>>) attributes {dimension_semantics = [#tpu.dimension_semantics<arbitrary>], iteration_bounds = array<i64: 1>, scalar_prefetch = 0 : i64, scratch_operands = 0 : i64, tpu.core_type = #tpu.core_type<tc>, window_params = [{transform_indices = @transform_0, window_bounds = array<i64: 8, 3>}, {pipeline_mode = #tpu.pipeline_mode<synchronous>, transform_indices = @transform_1, window_bounds = array<i64: 3, 512>}, {pipeline_mode = #tpu.pipeline_mode<synchronous>, transform_indices = @transform_2, window_bounds = array<i64: 1, 512>}, {pipeline_mode = #tpu.pipeline_mode<synchronous>, transform_indices = @transform_3, window_bounds = array<i64: 512, 2>}, {pipeline_mode = #tpu.pipeline_mode<synchronous>, transform_indices = @transform_4, window_bounds = array<i64: 1, 2>}, {transform_indices = @transform_5, window_bounds = array<i64: 8, 1>}, {transform_indices = @transform_6, window_bounds = array<i64: 8, 1>}]} {
    %c0 = arith.constant 0 : index
    %c0_0 = arith.constant 0 : index
    %0 = vector.load %arg1[%c0, %c0_0] : memref<8x3xf32, #tpu.memory_space<vmem>>, vector<8x3xf32>
    %c0_1 = arith.constant 0 : index
    %c0_2 = arith.constant 0 : index
    %1 = vector.load %arg3[%c0_1, %c0_2] : memref<1x512xf32, #tpu.memory_space<vmem>>, vector<1x512xf32>
    %2 = vector.extract_strided_slice %0 {offsets = [0, 0], sizes = [8, 1], strides = [1, 1]} : vector<8x3xf32> to vector<8x1xf32>
    %c0_3 = arith.constant 0 : index
    %c0_4 = arith.constant 0 : index
    %3 = vector.load %arg2[%c0_3, %c0_4] : memref<3x512xf32, #tpu.memory_space<vmem>>, vector<1x512xf32>
    %4 = vector.broadcast %2 : vector<8x1xf32> to vector<8x512xf32>
    %5 = vector.broadcast %3 : vector<1x512xf32> to vector<8x512xf32>
    %6 = arith.mulf %4, %5 : vector<8x512xf32>
    %7 = vector.broadcast %1 : vector<1x512xf32> to vector<8x512xf32>
    %8 = arith.addf %7, %6 : vector<8x512xf32>
    %9 = vector.extract_strided_slice %0 {offsets = [0, 1], sizes = [8, 1], strides = [1, 1]} : vector<8x3xf32> to vector<8x1xf32>
    %c1 = arith.constant 1 : index
    %c0_5 = arith.constant 0 : index
    %10 = vector.load %arg2[%c1, %c0_5] : memref<3x512xf32, #tpu.memory_space<vmem>>, vector<1x512xf32>
    %11 = vector.broadcast %9 : vector<8x1xf32> to vector<8x512xf32>
    %12 = vector.broadcast %10 : vector<1x512xf32> to vector<8x512xf32>
    %13 = arith.mulf %11, %12 : vector<8x512xf32>
    %14 = arith.addf %8, %13 : vector<8x512xf32>
    %15 = vector.extract_strided_slice %0 {offsets = [0, 2], sizes = [8, 1], strides = [1, 1]} : vector<8x3xf32> to vector<8x1xf32>
    %c2 = arith.constant 2 : index
    %c0_6 = arith.constant 0 : index
    %16 = vector.load %arg2[%c2, %c0_6] : memref<3x512xf32, #tpu.memory_space<vmem>>, vector<1x512xf32>
    %17 = vector.broadcast %15 : vector<8x1xf32> to vector<8x512xf32>
    %18 = vector.broadcast %16 : vector<1x512xf32> to vector<8x512xf32>
    %19 = arith.mulf %17, %18 : vector<8x512xf32>
    %20 = arith.addf %14, %19 : vector<8x512xf32>
    %cst = arith.constant 0.000000e+00 : f32
    %21 = vector.broadcast %cst : f32 to vector<8x512xf32>
    %22 = arith.maximumf %20, %21 : vector<8x512xf32>
    %c0_7 = arith.constant 0 : index
    %c0_8 = arith.constant 0 : index
    %23 = vector.load %arg4[%c0_7, %c0_8] : memref<512x2xf32, #tpu.memory_space<vmem>>, vector<512x2xf32>
    %cst_9 = arith.constant dense<0.000000e+00> : vector<8x2xf32>
    %24 = tpu.matmul %22, %23, %cst_9 {dimension_numbers = #tpu.dot_dimension_numbers<[1], [0], [0], [1], [0, 0, 1, 1], [], []>} : vector<8x512xf32>, vector<512x2xf32>, vector<8x2xf32> -> vector<8x2xf32>
    %c0_10 = arith.constant 0 : index
    %c0_11 = arith.constant 0 : index
    %25 = vector.load %arg5[%c0_10, %c0_11] : memref<1x2xf32, #tpu.memory_space<vmem>>, vector<1x2xf32>
    %26 = vector.broadcast %25 : vector<1x2xf32> to vector<8x2xf32>
    %27 = arith.addf %24, %26 : vector<8x2xf32>
    %28 = vector.extract_strided_slice %27 {offsets = [0, 0], sizes = [8, 1], strides = [1, 1]} : vector<8x2xf32> to vector<8x1xf32>
    %c0_12 = arith.constant 0 : index
    %c0_13 = arith.constant 0 : index
    %29 = vector.load %arg6[%c0_12, %c0_13] : memref<8x1xf32, #tpu.memory_space<vmem>>, vector<8x1xf32>
    tpu.vector_store %arg6[%c0_12, %c0_13], %28 {strides = array<i32>} : memref<8x1xf32, #tpu.memory_space<vmem>>, vector<8x1xf32>,
    %30 = vector.extract_strided_slice %27 {offsets = [0, 1], sizes = [8, 1], strides = [1, 1]} : vector<8x2xf32> to vector<8x1xf32>
    %31 = math.tanh %30 : vector<8x1xf32>
    %32 = math.exp %31 : vector<8x1xf32>
    %c0_14 = arith.constant 0 : index
    %c0_15 = arith.constant 0 : index
    %33 = vector.load %arg7[%c0_14, %c0_15] : memref<8x1xf32, #tpu.memory_space<vmem>>, vector<8x1xf32>
    tpu.vector_store %arg7[%c0_14, %c0_15], %32 {strides = array<i32>} : memref<8x1xf32, #tpu.memory_space<vmem>>, vector<8x1xf32>,
    return
  }
  func.func @transform_0(%arg0: i32) -> (i32, i32) {
    %c0_i32 = arith.constant 0 : i32
    %c0_i32_0 = arith.constant 0 : i32
    return %arg0, %c0_i32 : i32, i32
  }
  func.func @transform_1(%arg0: i32) -> (i32, i32) {
    %c0_i32 = arith.constant 0 : i32
    %c0_i32_0 = arith.constant 0 : i32
    %c0_i32_1 = arith.constant 0 : i32
    return %c0_i32, %c0_i32_0 : i32, i32
  }
  func.func @transform_2(%arg0: i32) -> (i32, i32) {
    %c0_i32 = arith.constant 0 : i32
    %c0_i32_0 = arith.constant 0 : i32
    %c0_i32_1 = arith.constant 0 : i32
    return %c0_i32, %c0_i32_0 : i32, i32
  }
  func.func @transform_3(%arg0: i32) -> (i32, i32) {
    %c0_i32 = arith.constant 0 : i32
    %c0_i32_0 = arith.constant 0 : i32
    %c0_i32_1 = arith.constant 0 : i32
    return %c0_i32, %c0_i32_0 : i32, i32
  }
  func.func @transform_4(%arg0: i32) -> (i32, i32) {
    %c0_i32 = arith.constant 0 : i32
    %c0_i32_0 = arith.constant 0 : i32
    %c0_i32_1 = arith.constant 0 : i32
    return %c0_i32, %c0_i32_0 : i32, i32
  }
  func.func @transform_5(%arg0: i32) -> (i32, i32) {
    %c0_i32 = arith.constant 0 : i32
    %c0_i32_0 = arith.constant 0 : i32
    return %arg0, %c0_i32 : i32, i32
  }
  func.func @transform_6(%arg0: i32) -> (i32, i32) {
    %c0_i32 = arith.constant 0 : i32
    %c0_i32_0 = arith.constant 0 : i32
    return %arg0, %c0_i32 : i32, i32
  }
}

</mosaic_0001>

<llo_original>
// kernel: mlp_gaussian_policy.1
$region0: #{mlp_gaussian_policy.1}
  #allocation0 [shape = 'u32[]', space=smem, size = 0x4, offset = 0x4, fixed_abs, tag = 'smem constant byte address 0x4 - core index']
  #allocation1 [shape = 'u32[144,128]{1,0:T(1,128)}', space=vmem, size = 0x12000, scoped, tag = 'internal scratch']
  %s0 = inlined_call_operand.vmem [shape: f32[8,3], index: 0, kind: input, shape index: {}]
  %s1 = inlined_call_operand.vmem [shape: f32[3,512], index: 1, kind: input, shape index: {}]
  %s2 = inlined_call_operand.vmem [shape: f32[1,512], index: 2, kind: input, shape index: {}]
  %s3 = inlined_call_operand.vmem [shape: f32[512,2], index: 3, kind: input, shape index: {}]
  %s4 = inlined_call_operand.vmem [shape: f32[1,2], index: 4, kind: input, shape index: {}]
  %s5 = inlined_call_operand.vmem [shape: f32[8,1], index: 5, kind: output, shape index: {0}]
  %s6 = inlined_call_operand.vmem [shape: f32[8,1], index: 6, kind: output, shape index: {1}]
  %7 = xla_tuple %s5, %s6
  %s8 = sld [smem:[#allocation0]]
  $region38: #{mlp_gaussian_policy.1} parent=0
    _
  %s10 = ssub.s32 1, %s8
  %s11 = scalar_select 0, %s10, %s8
  // Predicated region
  $region2: #{mlp_gaussian_policy.1} parent=0 // pred_check
    _
  $region3: #{mlp_gaussian_policy.1} parent=0 // pred_check_branch
    %13 = sbr.rel (0) target = $region5
  $region4: #{mlp_gaussian_policy.1} parent=0 // pred_region
    _
  $region5: #{mlp_gaussian_policy.1} parent=0 // pred_fallthru
    _
  // Predicated region
  $region6: #{mlp_gaussian_policy.1} parent=0 // pred_check
    _
  $region7: #{mlp_gaussian_policy.1} parent=0 // pred_check_branch
    %15 = sbr.rel (0) target = $region9
  $region8: #{mlp_gaussian_policy.1} parent=0 // pred_region
    _
  $region9: #{mlp_gaussian_policy.1} parent=0 // pred_fallthru
    _
  // Predicated region
  $region10: #{mlp_gaussian_policy.1} parent=0 // pred_check
    _
  $region11: #{mlp_gaussian_policy.1} parent=0 // pred_check_branch
    %17 = sbr.rel (0) target = $region13
  $region12: #{mlp_gaussian_policy.1} parent=0 // pred_region
    _
  $region13: #{mlp_gaussian_policy.1} parent=0 // pred_fallthru
    _
  // Predicated region
  $region14: #{mlp_gaussian_policy.1} parent=0 // pred_check
    _
  $region15: #{mlp_gaussian_policy.1} parent=0 // pred_check_branch
    %19 = sbr.rel (0) target = $region17
  $region16: #{mlp_gaussian_policy.1} parent=0 // pred_region
    _
  $region17: #{mlp_gaussian_policy.1} parent=0 // pred_fallthru
    _
  // Predicated region
  $region18: #{mlp_gaussian_policy.1} parent=0 // pred_check
    _
  $region19: #{mlp_gaussian_policy.1} parent=0 // pred_check_branch
    %21 = sbr.rel (0) target = $region21
  $region20: #{mlp_gaussian_policy.1} parent=0 // pred_region
    _
  $region21: #{mlp_gaussian_policy.1} parent=0 // pred_fallthru
    _
  %v22 = vld [vmem:[%s0] sm:$0xff]
  %v23 = vld [vmem:[%s2] sm:$0xf]
  %v24 = vld [vmem:[%s1] ss:$4 sm:$0xf]
  %26 = vset.pattern.permute.xlu0 0
  %27 = vperm.xlu0 %26, %v22
  %v28 = vpop.permute.xlu0 %27
  %v31 = vlaneseq
  %v32 = vshrl.u32 %v31, 7
  %v33 = vsub.s32 0, %v32
  %v34 = vrot.slane %v24, %v33
  %v35 = vlaneseq
  %v36 = vshrl.u32 %v35, 7
  %v37 = vsub.s32 1, %v36
  %v38 = vrot.slane %v24, %v37
  %v39 = vlaneseq
  %v40 = vshrl.u32 %v39, 7
  %v41 = vsub.s32 2, %v40
  %v42 = vrot.slane %v24, %v41
  %v43 = vlaneseq
  %v44 = vshrl.u32 %v43, 7
  %v45 = vsub.s32 3, %v44
  %v46 = vrot.slane %v24, %v45
  %v51 = vmul.f32 %v28, %v34
  %v52 = vmul.f32 %v28, %v38
  %v53 = vmul.f32 %v28, %v42
  %v54 = vmul.f32 %v28, %v46
  %v56 = vlaneseq
  %v57 = vshrl.u32 %v56, 7
  %v58 = vsub.s32 0, %v57
  %v59 = vrot.slane %v23, %v58
  %v60 = vlaneseq
  %v61 = vshrl.u32 %v60, 7
  %v62 = vsub.s32 1, %v61
  %v63 = vrot.slane %v23, %v62
  %v64 = vlaneseq
  %v65 = vshrl.u32 %v64, 7
  %v66 = vsub.s32 2, %v65
  %v67 = vrot.slane %v23, %v66
  %v68 = vlaneseq
  %v69 = vshrl.u32 %v68, 7
  %v70 = vsub.s32 3, %v69
  %v71 = vrot.slane %v23, %v70
  %v76 = vadd.f32 %v59, %v51
  %v77 = vadd.f32 %v63, %v52
  %v78 = vadd.f32 %v67, %v53
  %v79 = vadd.f32 %v71, %v54
  %s80 = scalar_lea.vmem %s1, 1
  %v81 = vld [vmem:[%s80] ss:$4 sm:$0xf]
  %82 = vset.pattern.permute.xlu0 1
  %83 = vperm.xlu0 %82, %v22
  %v84 = vpop.permute.xlu0 %83
  %v87 = vlaneseq
  %v88 = vshrl.u32 %v87, 7
  %v89 = vsub.s32 0, %v88
  %v90 = vrot.slane %v81, %v89
  %v91 = vlaneseq
  %v92 = vshrl.u32 %v91, 7
  %v93 = vsub.s32 1, %v92
  %v94 = vrot.slane %v81, %v93
  %v95 = vlaneseq
  %v96 = vshrl.u32 %v95, 7
  %v97 = vsub.s32 2, %v96
  %v98 = vrot.slane %v81, %v97
  %v99 = vlaneseq
  %v100 = vshrl.u32 %v99, 7
  %v101 = vsub.s32 3, %v100
  %v102 = vrot.slane %v81, %v101
  %v107 = vmul.f32 %v84, %v90
  %v108 = vmul.f32 %v84, %v94
  %v109 = vmul.f32 %v84, %v98
  %v110 = vmul.f32 %v84, %v102
  %v111 = vadd.f32 %v76, %v107
  %v112 = vadd.f32 %v77, %v108
  %v113 = vadd.f32 %v78, %v109
  %v114 = vadd.f32 %v79, %v110
  %s115 = scalar_lea.vmem %s1, 2
  %v116 = vld [vmem:[%s115] ss:$4 sm:$0xf]
  %117 = vset.pattern.permute.xlu0 2
  %118 = vperm.xlu0 %117, %v22
  %v119 = vpop.permute.xlu0 %118
  %v122 = vlaneseq
  %v123 = vshrl.u32 %v122, 7
  %v124 = vsub.s32 0, %v123
  %v125 = vrot.slane %v116, %v124
  %v126 = vlaneseq
  %v127 = vshrl.u32 %v126, 7
  %v128 = vsub.s32 1, %v127
  %v129 = vrot.slane %v116, %v128
  %v130 = vlaneseq
  %v131 = vshrl.u32 %v130, 7
  %v132 = vsub.s32 2, %v131
  %v133 = vrot.slane %v116, %v132
  %v134 = vlaneseq
  %v135 = vshrl.u32 %v134, 7
  %v136 = vsub.s32 3, %v135
  %v137 = vrot.slane %v116, %v136
  %v142 = vmul.f32 %v119, %v125
  %v143 = vmul.f32 %v119, %v129
  %v144 = vmul.f32 %v119, %v133
  %v145 = vmul.f32 %v119, %v137
  %v146 = vadd.f32 %v111, %v142
  %v147 = vadd.f32 %v112, %v143
  %v148 = vadd.f32 %v113, %v144
  %v149 = vadd.f32 %v114, %v145
  %v150 = vmax.f32 %v146, 0.0
  %v151 = vmax.f32 %v147, 0.0
  %v152 = vmax.f32 %v148, 0.0
  %v153 = vmax.f32 %v149, 0.0
  %v154 = vld [vmem:[%s3] sm:$0xff]
  %v155 = vld [vmem:[%s3 + $0x8] sm:$0xff]
  %v156 = vld [vmem:[%s3 + $0x10] sm:$0xff]
  %v157 = vld [vmem:[%s3 + $0x18] sm:$0xff]
  %v158 = vld [vmem:[%s3 + $0x20] sm:$0xff]
  %v159 = vld [vmem:[%s3 + $0x28] sm:$0xff]
  %v160 = vld [vmem:[%s3 + $0x30] sm:$0xff]
  %v161 = vld [vmem:[%s3 + $0x38] sm:$0xff]
  %v162 = vld [vmem:[%s3 + $0x40] sm:$0xff]
  %v163 = vld [vmem:[%s3 + $0x48] sm:$0xff]
  %v164 = vld [vmem:[%s3 + $0x50] sm:$0xff]
  %v165 = vld [vmem:[%s3 + $0x58] sm:$0xff]
  %v166 = vld [vmem:[%s3 + $0x60] sm:$0xff]
  %v167 = vld [vmem:[%s3 + $0x68] sm:$0xff]
  %v168 = vld [vmem:[%s3 + $0x70] sm:$0xff]
  %v169 = vld [vmem:[%s3 + $0x78] sm:$0xff]
  %v170 = vld [vmem:[%s3 + $0x80] sm:$0xff]
  %v171 = vld [vmem:[%s3 + $0x88] sm:$0xff]
  %v172 = vld [vmem:[%s3 + $0x90] sm:$0xff]
  %v173 = vld [vmem:[%s3 + $0x98] sm:$0xff]
  %v174 = vld [vmem:[%s3 + $0xa0] sm:$0xff]
  %v175 = vld [vmem:[%s3 + $0xa8] sm:$0xff]
  %v176 = vld [vmem:[%s3 + $0xb0] sm:$0xff]
  %v177 = vld [vmem:[%s3 + $0xb8] sm:$0xff]
  %v178 = vld [vmem:[%s3 + $0xc0] sm:$0xff]
  %v179 = vld [vmem:[%s3 + $0xc8] sm:$0xff]
  %v180 = vld [vmem:[%s3 + $0xd0] sm:$0xff]
  %v181 = vld [vmem:[%s3 + $0xd8] sm:$0xff]
  %v182 = vld [vmem:[%s3 + $0xe0] sm:$0xff]
  %v183 = vld [vmem:[%s3 + $0xe8] sm:$0xff]
  %v184 = vld [vmem:[%s3 + $0xf0] sm:$0xff]
  %v185 = vld [vmem:[%s3 + $0xf8] sm:$0xff]
  %v186 = vld [vmem:[%s3 + $0x100] sm:$0xff]
  %v187 = vld [vmem:[%s3 + $0x108] sm:$0xff]
  %v188 = vld [vmem:[%s3 + $0x110] sm:$0xff]
  %v189 = vld [vmem:[%s3 + $0x118] sm:$0xff]
  %v190 = vld [vmem:[%s3 + $0x120] sm:$0xff]
  %v191 = vld [vmem:[%s3 + $0x128] sm:$0xff]
  %v192 = vld [vmem:[%s3 + $0x130] sm:$0xff]
  %v193 = vld [vmem:[%s3 + $0x138] sm:$0xff]
  %v194 = vld [vmem:[%s3 + $0x140] sm:$0xff]
  %v195 = vld [vmem:[%s3 + $0x148] sm:$0xff]
  %v196 = vld [vmem:[%s3 + $0x150] sm:$0xff]
  %v197 = vld [vmem:[%s3 + $0x158] sm:$0xff]
  %v198 = vld [vmem:[%s3 + $0x160] sm:$0xff]
  %v199 = vld [vmem:[%s3 + $0x168] sm:$0xff]
  %v200 = vld [vmem:[%s3 + $0x170] sm:$0xff]
  %v201 = vld [vmem:[%s3 + $0x178] sm:$0xff]
  %v202 = vld [vmem:[%s3 + $0x180] sm:$0xff]
  %v203 = vld [vmem:[%s3 + $0x188] sm:$0xff]
  %v204 = vld [vmem:[%s3 + $0x190] sm:$0xff]
  %v205 = vld [vmem:[%s3 + $0x198] sm:$0xff]
  %v206 = vld [vmem:[%s3 + $0x1a0] sm:$0xff]
  %v207 = vld [vmem:[%s3 + $0x1a8] sm:$0xff]
  %v208 = vld [vmem:[%s3 + $0x1b0] sm:$0xff]
  %v209 = vld [vmem:[%s3 + $0x1b8] sm:$0xff]
  %v210 = vld [vmem:[%s3 + $0x1c0] sm:$0xff]
  %v211 = vld [vmem:[%s3 + $0x1c8] sm:$0xff]
  %v212 = vld [vmem:[%s3 + $0x1d0] sm:$0xff]
  %v213 = vld [vmem:[%s3 + $0x1d8] sm:$0xff]
  %v214 = vld [vmem:[%s3 + $0x1e0] sm:$0xff]
  %v215 = vld [vmem:[%s3 + $0x1e8] sm:$0xff]
  %v216 = vld [vmem:[%s3 + $0x1f0] sm:$0xff]
  %v217 = vld [vmem:[%s3 + $0x1f8] sm:$0xff]
  %v218 = vld [vmem:[%s4] sm:$0x1]
  %v220 = vlaneseq
  %v221 = vshrl.u32 %v220, 7
  %v222 = vsub.s32 0, %v221
  %v223 = vrot.slane %v218, %v222
  %225 = vmatprep.subr.mxu0 0.0
  %226 = vmatpush1.msra.mxu0 %v154
  %227 = vmatprep.subr.mxu0 0.0
  %228 = vmatpush1.msra.mxu0 %v155
  %229 = vmatprep.subr.mxu0 0.0
  %230 = vmatpush1.msra.mxu0 %v156
  %231 = vmatprep.subr.mxu0 0.0
  %232 = vmatpush1.msra.mxu0 %v157
  %233 = vmatprep.subr.mxu0 0.0
  %234 = vmatpush1.msra.mxu0 %v158
  %235 = vmatprep.subr.mxu0 0.0
  %236 = vmatpush1.msra.mxu0 %v159
  %237 = vmatprep.subr.mxu0 0.0
  %238 = vmatpush1.msra.mxu0 %v160
  %239 = vmatprep.subr.mxu0 0.0
  %240 = vmatpush1.msra.mxu0 %v161
  %241 = vmatprep.subr.mxu0 0.0
  %242 = vmatpush1.msra.mxu0 %v162
  %243 = vmatprep.subr.mxu0 0.0
  %244 = vmatpush1.msra.mxu0 %v163
  %245 = vmatprep.subr.mxu0 0.0
  %246 = vmatpush1.msra.mxu0 %v164
  %247 = vmatprep.subr.mxu0 0.0
  %248 = vmatpush1.msra.mxu0 %v165
  %249 = vmatprep.subr.mxu0 0.0
  %250 = vmatpush1.msra.mxu0 %v166
  %251 = vmatprep.subr.mxu0 0.0
  %252 = vmatpush1.msra.mxu0 %v167
  %253 = vmatprep.subr.mxu0 0.0
  %254 = vmatpush1.msra.mxu0 %v168
  %255 = vmatprep.subr.mxu0 0.0
  %256 = vmatpush1.msra.mxu0 %v169
  %257 = vmatprep.subr.mxu0 0.0
  %258 = vmatpush1.msra.mxu0 %v170
  %259 = vmatprep.subr.mxu0 0.0
  %260 = vmatpush1.msra.mxu0 %v171
  %261 = vmatprep.subr.mxu0 0.0
  %262 = vmatpush1.msra.mxu0 %v172
  %263 = vmatprep.subr.mxu0 0.0
  %264 = vmatpush1.msra.mxu0 %v173
  %265 = vmatprep.subr.mxu0 0.0
  %266 = vmatpush1.msra.mxu0 %v174
  %267 = vmatprep.subr.mxu0 0.0
  %268 = vmatpush1.msra.mxu0 %v175
  %269 = vmatprep.subr.mxu0 0.0
  %270 = vmatpush1.msra.mxu0 %v176
  %271 = vmatprep.subr.mxu0 0.0
  %272 = vmatpush1.msra.mxu0 %v177
  %273 = vmatprep.subr.mxu0 0.0
  %274 = vmatpush1.msra.mxu0 %v178
  %275 = vmatprep.subr.mxu0 0.0
  %276 = vmatpush1.msra.mxu0 %v179
  %277 = vmatprep.subr.mxu0 0.0
  %278 = vmatpush1.msra.mxu0 %v180
  %279 = vmatprep.subr.mxu0 0.0
  %280 = vmatpush1.msra.mxu0 %v181
  %281 = vmatprep.subr.mxu0 0.0
  %282 = vmatpush1.msra.mxu0 %v182
  %283 = vmatprep.subr.mxu0 0.0
  %284 = vmatpush1.msra.mxu0 %v183
  %285 = vmatprep.subr.mxu0 0.0
  %286 = vmatpush1.msra.mxu0 %v184
  %287 = vmatprep.subr.mxu0 0.0
  %288 = vmatpush1.msra.mxu0 %v185
  %289 = vmatprep.mubr.f32.mxu0 %v151
  %290 = vmatmul.mubr.f32.gmra.mrb[0].mxu0 %v150
  %v291 = vpop.f32.mrb[0].mxu0
  %v292 = vadd.f32 %v223, %v291
  %v293 = vpop.f32.mrb[0].mxu0
  %294 = vdwg.mxu0
  %295 = vmatprep.subr.mxu0 0.0
  %296 = vmatpush1.msra.mxu0 %v186
  %297 = vmatprep.subr.mxu0 0.0
  %298 = vmatpush1.msra.mxu0 %v187
  %299 = vmatprep.subr.mxu0 0.0
  %300 = vmatpush1.msra.mxu0 %v188
  %301 = vmatprep.subr.mxu0 0.0
  %302 = vmatpush1.msra.mxu0 %v189
  %303 = vmatprep.subr.mxu0 0.0
  %304 = vmatpush1.msra.mxu0 %v190
  %305 = vmatprep.subr.mxu0 0.0
  %306 = vmatpush1.msra.mxu0 %v191
  %307 = vmatprep.subr.mxu0 0.0
  %308 = vmatpush1.msra.mxu0 %v192
  %309 = vmatprep.subr.mxu0 0.0
  %310 = vmatpush1.msra.mxu0 %v193
  %311 = vmatprep.subr.mxu0 0.0
  %312 = vmatpush1.msra.mxu0 %v194
  %313 = vmatprep.subr.mxu0 0.0
  %314 = vmatpush1.msra.mxu0 %v195
  %315 = vmatprep.subr.mxu0 0.0
  %316 = vmatpush1.msra.mxu0 %v196
  %317 = vmatprep.subr.mxu0 0.0
  %318 = vmatpush1.msra.mxu0 %v197
  %319 = vmatprep.subr.mxu0 0.0
  %320 = vmatpush1.msra.mxu0 %v198
  %321 = vmatprep.subr.mxu0 0.0
  %322 = vmatpush1.msra.mxu0 %v199
  %323 = vmatprep.subr.mxu0 0.0
  %324 = vmatpush1.msra.mxu0 %v200
  %325 = vmatprep.subr.mxu0 0.0
  %326 = vmatpush1.msra.mxu0 %v201
  %327 = vmatprep.subr.mxu0 0.0
  %328 = vmatpush1.msra.mxu0 %v202
  %329 = vmatprep.subr.mxu0 0.0
  %330 = vmatpush1.msra.mxu0 %v203
  %331 = vmatprep.subr.mxu0 0.0
  %332 = vmatpush1.msra.mxu0 %v204
  %333 = vmatprep.subr.mxu0 0.0
  %334 = vmatpush1.msra.mxu0 %v205
  %335 = vmatprep.subr.mxu0 0.0
  %336 = vmatpush1.msra.mxu0 %v206
  %337 = vmatprep.subr.mxu0 0.0
  %338 = vmatpush1.msra.mxu0 %v207
  %339 = vmatprep.subr.mxu0 0.0
  %340 = vmatpush1.msra.mxu0 %v208
  %341 = vmatprep.subr.mxu0 0.0
  %342 = vmatpush1.msra.mxu0 %v209
  %343 = vmatprep.subr.mxu0 0.0
  %344 = vmatpush1.msra.mxu0 %v210
  %345 = vmatprep.subr.mxu0 0.0
  %346 = vmatpush1.msra.mxu0 %v211
  %347 = vmatprep.subr.mxu0 0.0
  %348 = vmatpush1.msra.mxu0 %v212
  %349 = vmatprep.subr.mxu0 0.0
  %350 = vmatpush1.msra.mxu0 %v213
  %351 = vmatprep.subr.mxu0 0.0
  %352 = vmatpush1.msra.mxu0 %v214
  %353 = vmatprep.subr.mxu0 0.0
  %354 = vmatpush1.msra.mxu0 %v215
  %355 = vmatprep.subr.mxu0 0.0
  %356 = vmatpush1.msra.mxu0 %v216
  %357 = vmatprep.subr.mxu0 0.0
  %358 = vmatpush1.msra.mxu0 %v217
  %359 = vmatprep.mubr.f32.mxu0 %v153
  %360 = vmatmul.mubr.f32.gmra.mrb[0].mxu0 %v152
  %v361 = vpop.f32.mrb[0].mxu0
  %v362 = vadd.f32 %v292, %v361
  %v363 = vpop.f32.mrb[0].mxu0
  %364 = vdwg.mxu0
  %vm365 = vcmask 7168
  %366 = vst.msk [vmem:[%s5] sm:$0xff] %vm365, %v362
  %v367 = vtanh.pop %v362
  %v368 = vmul.f32 %v367, 1.442695
  %v369 = vpow.pop %v368
  %371 = vrot.lane.b32.xlu0 %v369, 127
  %v372 = vpop.permute.xlu0 %371
  %374 = vst.msk [vmem:[%s6] sm:$0xff] %vm365, %v372
  // Predicated region
  $region22: #{mlp_gaussian_policy.1} parent=0 // pred_check
    _
  $region23: #{mlp_gaussian_policy.1} parent=0 // pred_check_branch
    %376 = sbr.rel (0) target = $region25
  $region24: #{mlp_gaussian_policy.1} parent=0 // pred_region
    _
  $region25: #{mlp_gaussian_policy.1} parent=0 // pred_fallthru
    _
  // Predicated region
  $region26: #{mlp_gaussian_policy.1} parent=0 // pred_check
    _
  $region27: #{mlp_gaussian_policy.1} parent=0 // pred_check_branch
    %378 = sbr.rel (0) target = $region29
  $region28: #{mlp_gaussian_policy.1} parent=0 // pred_region
    _
  $region29: #{mlp_gaussian_policy.1} parent=0 // pred_fallthru
    _
  // Predicated region
  $region30: #{mlp_gaussian_policy.1} parent=0 // pred_check
    _
  $region31: #{mlp_gaussian_policy.1} parent=0 // pred_check_branch
    %380 = sbr.rel (0) target = $region33
  $region32: #{mlp_gaussian_policy.1} parent=0 // pred_region
    _
  $region33: #{mlp_gaussian_policy.1} parent=0 // pred_fallthru
    _
  // Predicated region
  $region34: #{mlp_gaussian_policy.1} parent=0 // pred_check
    _
  $region35: #{mlp_gaussian_policy.1} parent=0 // pred_check_branch
    %382 = sbr.rel (0) target = $region37
  $region36: #{mlp_gaussian_policy.1} parent=0 // pred_region
    _
  $region37: #{mlp_gaussian_policy.1} parent=0 // pred_fallthru
    _

</llo_original>
